<compile_context>
chip_gen: v7x
topology: tpu7x:2x2x1
jax: 0.10.0
libtpu: 0.0.40
codegen_flags: <defaults>
</compile_context>

<pallas_src>
import numpy as np
import jax
import jax.numpy as jnp
from jax.experimental import pallas as pl
from jax.experimental.pallas import tpu as pltpu


# ----------------------------------------------------------------------------
# Parameter construction (mirrors PESineInterpolation.__init__, deterministic)
# ----------------------------------------------------------------------------
def build_pos_emb(embed_dim, grid_size=(48, 48), temperature=10000.0):
    """Returns pos_emb of shape (1, embed_dim, h, w), NCHW, float32."""
    h, w = grid_size
    assert embed_dim % 4 == 0, "embed_dim must be divisible by 4"
    gw = np.arange(w, dtype=np.float32)
    gh = np.arange(h, dtype=np.float32)
    grid_w, grid_h = np.meshgrid(gw, gh, indexing="ij")  # torch.meshgrid default 'ij'
    pos_dim = embed_dim // 4
    omega = np.arange(pos_dim, dtype=np.float32) / pos_dim
    omega = 1.0 / temperature ** omega
    out_w = np.einsum("m,d->md", grid_w.reshape(-1), omega)
    out_h = np.einsum("m,d->md", grid_h.reshape(-1), omega)
    pe = np.concatenate(
        [np.sin(out_w), np.cos(out_w), np.sin(out_h), np.cos(out_h)], axis=1
    )
    pe = pe.reshape(1, h, w, -1).transpose(0, 3, 1, 2)  # (1, C, h, w)
    return jnp.asarray(pe, dtype=jnp.float32)


def bicubic_weight_matrix(out_size, in_size):
    """(out_size, in_size) matrix reproducing PyTorch bicubic interpolation along one axis
    (align_corners=False, A=-0.75, src = scale*(dst+0.5)-0.5, border-clamped 4 taps).
    Exactly the identity when out_size == in_size."""
    A = -0.75
    scale = in_size / out_size
    dst = np.arange(out_size, dtype=np.float64)
    src = scale * (dst + 0.5) - 0.5
    i0 = np.floor(src).astype(np.int64)
    t = src - i0

    def cubic1(xx):  # |x| <= 1
        return ((A + 2.0) * xx - (A + 3.0)) * xx * xx + 1.0

    def cubic2(xx):  # 1 < |x| < 2
        return ((A * xx - 5.0 * A) * xx + 8.0 * A) * xx - 4.0 * A

    w = np.stack([cubic2(t + 1.0), cubic1(t), cubic1(1.0 - t), cubic2(2.0 - t)], axis=1)
    idx = np.clip(np.stack([i0 - 1, i0, i0 + 1, i0 + 2], axis=1), 0, in_size - 1)
    mat = np.zeros((out_size, in_size), dtype=np.float64)
    rows = np.repeat(np.arange(out_size)[:, None], 4, axis=1)
    np.add.at(mat, (rows, idx), w)
    return mat.astype(np.float32)


# ----------------------------------------------------------------------------
# Hardware / block-size helpers
# ----------------------------------------------------------------------------
def _sublane_multiple(itemsize):
    # Native sublane tile: 8 rows for 4-byte, 16 for 2-byte, 32 for 1-byte dtypes.
    return max(8, 32 // int(itemsize))


def _num_tensorcores():
    """Best-effort TensorCores-per-chip count (2 on v7x, 1 on v5e/v6e).  Conservative
    default of 1 if the query or the attribute name is unavailable."""
    try:
        info = pltpu.get_tpu_info()
    except Exception:
        return 1
    for name in ("num_cores", "tensorcore_count", "num_tensorcores", "cores_per_chip"):
        v = getattr(info, name, None)
        if isinstance(v, int) and v > 0:
            return v
    return 1


# ----------------------------------------------------------------------------
# Pallas kernels
# ----------------------------------------------------------------------------
def _pe_kron_kernel(pos_ref, w2dt_ref, pe_ref):
    # pos_ref: (tcb, K) f32;  w2dt_ref: (K, hwb) f32;  pe_ref: (tcb, hwb) out dtype.
    # One MXU matmul per grid step, result written directly in the lane-dense
    # (channels, H*W) layout consumed by the broadcast add.
    pe_ref[...] = jnp.dot(
        pos_ref[...], w2dt_ref[...], preferred_element_type=jnp.float32
    ).astype(pe_ref.dtype)


def _add_pe_kernel(x_ref, pe_ref, o_ref):
    # x_ref/o_ref: (nb, tc, HW); pe_ref: (tc, HW).  jnp promotion (e.g. bf16 x + f32 pe)
    # matches torch's `x + pos_emb` type promotion.
    o_ref[...] = (x_ref[...] + pe_ref[...][None]).astype(o_ref.dtype)


# ----------------------------------------------------------------------------
# Wrappers
# ----------------------------------------------------------------------------
def _interpolate_pos_emb(pos_flat, w2dt, out_dtype, *, budget_bytes=20 << 20):
    """One-time cost, independent of N.
    pos_flat: (C, Hin*Win) f32; w2dt: (Hin*Win, H*W) f32 = kron(Wh, Ww)^T.
    Returns pe_flat: (C, H*W) in out_dtype."""
    C, K = pos_flat.shape
    K2, HW = w2dt.shape
    assert K == K2
    out_item = np.dtype(out_dtype).itemsize

    tc_cands = sorted(d for d in range(1, C + 1) if C % d == 0 and (d % 8 == 0 or d == C))
    hw_cands = sorted({HW} | {d for d in range(128, HW + 1) if HW % d == 0 and d % 128 == 0})

    def footprint(tcb, hwb):  # double-buffered pos + w2dt + pe tiles
        return 2 * (tcb * K * 4 + K * hwb * 4 + tcb * hwb * out_item)

    hwb = min(hw_cands)
    for cand in sorted(hw_cands, reverse=True):
        if footprint(tc_cands[0], cand) <= budget_bytes:
            hwb = cand
            break
    tcb = max([d for d in tc_cands if footprint(d, hwb) <= budget_bytes] or [tc_cands[0]])

    return pl.pallas_call(
        _pe_kron_kernel,
        out_shape=jax.ShapeDtypeStruct((C, HW), out_dtype),
        grid_spec=pltpu.PrefetchScalarGridSpec(
            num_scalar_prefetch=0,
            grid=(C // tcb, HW // hwb),
            in_specs=[
                pl.BlockSpec((tcb, K), lambda c, h: (c, 0)),
                pl.BlockSpec((K, hwb), lambda c, h: (0, h)),
            ],
            out_specs=pl.BlockSpec((tcb, hwb), lambda c, h: (c, h)),
        ),
        compiler_params=pltpu.CompilerParams(
            dimension_semantics=("parallel", "parallel"),
            vmem_limit_bytes=40 << 20,
        ),
    )(pos_flat, w2dt)


def _broadcast_add(x_flat, pe_flat, out_dtype, *, in_place=False, budget_bytes=20 << 20):
    """x_flat: (N, C, HW); pe_flat: (C, HW) in out_dtype.  Returns x_flat + pe_flat[None]."""
    N, C, HW = x_flat.shape
    x_item = x_flat.dtype.itemsize
    out_item = np.dtype(out_dtype).itemsize

    align = max(_sublane_multiple(x_item), _sublane_multiple(out_item))
    tc_cands = sorted(d for d in range(1, C + 1) if C % d == 0 and (d % align == 0 or d == C))
    nb_cands = sorted(d for d in range(1, N + 1) if N % d == 0)

    def footprint(nb, tc):  # true double-buffered footprint: x + pe + out tiles
        return 2 * (nb * tc * HW * x_item + tc * HW * out_item + nb * tc * HW * out_item)

    tc = max([d for d in tc_cands if footprint(1, d) <= budget_bytes] or [tc_cands[0]])
    nb = max([d for d in nb_cands if footprint(d, tc) <= budget_bytes] or [1])

    # v7x (2 TensorCores): make sure both cores get work when the whole problem fits in
    # one block.  Prefer splitting the batch axis so the pe tile keeps being DMA'd only
    # once per channel block; no extra grid steps are forced on v5e/v6e (1 TC).
    if _num_tensorcores() >= 2 and (C // tc) * (N // nb) < 2:
        if nb > 1:
            nb = max([d for d in nb_cands if d <= nb // 2] or [nb])
        else:
            smaller = [d for d in tc_cands if d < tc]
            if smaller:
                tc = max(smaller)

    extra = {}
    if in_place and x_flat.dtype == np.dtype(out_dtype):
        extra["input_output_aliases"] = {0: 0}

    return pl.pallas_call(
        _add_pe_kernel,
        out_shape=jax.ShapeDtypeStruct((N, C, HW), out_dtype),
        grid_spec=pltpu.PrefetchScalarGridSpec(
            num_scalar_prefetch=0,
            # Channel blocks outer, batch blocks inner: the pe block index is constant
            # across the inner loop, so pe is DMA'd once per channel block, not per n.
            grid=(C // tc, N // nb),
            in_specs=[
                pl.BlockSpec((nb, tc, HW), lambda c, n: (n, c, 0)),
                pl.BlockSpec((tc, HW), lambda c, n: (c, 0)),
            ],
            out_specs=pl.BlockSpec((nb, tc, HW), lambda c, n: (n, c, 0)),
        ),
        compiler_params=pltpu.CompilerParams(
            dimension_semantics=("parallel", "parallel"),
            vmem_limit_bytes=40 << 20,
        ),
        **extra,
    )(x_flat, pe_flat)


def pe_sine_interpolation_forward(x, pos_emb, *, in_place=False):
    """Forward pass of PESineInterpolation. x: (N, C, H, W); pos_emb: (1, C, Hin, Win)."""
    N, C, H, W = x.shape
    assert pos_emb.shape[0] == 1 and pos_emb.shape[1] == C
    Hin, Win = pos_emb.shape[2], pos_emb.shape[3]
    out_dtype = jnp.result_type(x.dtype, pos_emb.dtype)  # torch-style type promotion
    HW = H * W
    # TODO(synk): if H*W is not a multiple of 128 the flattened add's lane dim is sparse
    # (masked vst on the tail); pad HW to a 128-multiple for such shapes if they matter.
    pos = pos_emb[0]  # (C, Hin, Win)

    if (Hin, Win) == (H, W):
        # A same-size bicubic resample is exactly the identity -> pure broadcast add,
        # matching the original module's numerics regardless of which branch its quirky
        # guard (C vs H, grid_h vs W) would take.
        pe_flat = pos.reshape(C, HW).astype(out_dtype)
    else:
        # The original guard is `pos_emb.shape[1] != H or pos_emb.shape[2] != W`.  When it
        # would NOT fire despite a real spatial mismatch, torch's broadcast add raises;
        # mirror that behaviour.
        if not (C != H or Hin != W):
            raise ValueError(
                "pos_emb spatial size does not match the input and the original "
                "module's broadcast add would fail")
        wh = bicubic_weight_matrix(H, Hin)  # (H, Hin)
        ww = bicubic_weight_matrix(W, Win)  # (W, Win)
        # kron(Wh, Ww)^T has shape (Hin*Win, H*W): pe_flat = pos_flat @ kron^T is a single
        # MXU matmul that directly emits the lane-dense (C, H*W) layout the add consumes.
        w2dt = jnp.asarray(np.kron(wh, ww).T.copy())
        pe_flat = _interpolate_pos_emb(
            pos.reshape(C, Hin * Win).astype(jnp.float32), w2dt, out_dtype)

    out_flat = _broadcast_add(x.reshape(N, C, HW), pe_flat, out_dtype, in_place=in_place)
    return out_flat.reshape(N, C, H, W)


# ----------------------------------------------------------------------------
# Pure-JAX reference (same math) for verification
# ----------------------------------------------------------------------------
def reference_forward(x, pos_emb):
    _, _, H, W = x.shape
    Hin, Win = pos_emb.shape[2], pos_emb.shape[3]
    if (Hin, Win) == (H, W):
        pe = pos_emb[0]
    else:
        wh = jnp.asarray(bicubic_weight_matrix(H, Hin))
        ww = jnp.asarray(bicubic_weight_matrix(W, Win))
        pe = jnp.einsum("hi,cij,wj->chw", wh, pos_emb[0].astype(jnp.float32), ww)
    return x + pe[None]


if __name__ == "__main__":
    key = jax.random.PRNGKey(0)
    embed_dim = 16  # C
    x = jax.random.normal(key, (2, embed_dim, 16, 16), dtype=jnp.float32)

    # Case 1: pos_emb built on an (8, 8) grid -> bicubic upsample to (16, 16), then add.
    pos_emb = build_pos_emb(embed_dim, grid_size=(8, 8))
    out = pe_sine_interpolation_forward(x, pos_emb)
    jax.block_until_ready(out)
    np.testing.assert_allclose(
        np.asarray(out), np.asarray(reference_forward(x, pos_emb)), rtol=1e-5, atol=1e-5
    )

    # Case 2: grid matches the input spatial size -> identity path (pure add, no matmul).
    pos_emb2 = build_pos_emb(embed_dim, grid_size=(16, 16))
    out2 = pe_sine_interpolation_forward(x, pos_emb2)
    jax.block_until_ready(out2)
    np.testing.assert_allclose(
        np.asarray(out2), np.asarray(reference_forward(x, pos_emb2)), rtol=1e-5, atol=1e-5
    )

    # Case 3: bf16 input -> output type-promotes to f32, matching torch's `x + pos_emb`.
    x_bf16 = x.astype(jnp.bfloat16)
    out3 = pe_sine_interpolation_forward(x_bf16, pos_emb2)
    jax.block_until_ready(out3)
    assert out3.dtype == jnp.float32
    np.testing.assert_allclose(
        np.asarray(out3), np.asarray(reference_forward(x_bf16, pos_emb2)),
        rtol=1e-5, atol=1e-5
    )

    print("KERNEL_OK")
</pallas_src>

<mosaic_0001>
module attributes {stable_mosaic.version = 11 : i64} {
  func.func @_pe_kron_kernel(%arg0: i32, %arg1: i32, %arg2: memref<16x64xf32, #tpu.memory_space<vmem>>, %arg3: memref<64x256xf32, #tpu.memory_space<vmem>>, %arg4: memref<16x256xf32, #tpu.memory_space<vmem>>) attributes {dimension_semantics = [#tpu.dimension_semantics<parallel>, #tpu.dimension_semantics<parallel>], iteration_bounds = array<i64: 1, 1>, scalar_prefetch = 0 : i64, scratch_operands = 0 : i64, tpu.core_type = #tpu.core_type<tc>, window_params = [{transform_indices = @transform_0, window_bounds = array<i64: 16, 64>}, {transform_indices = @transform_1, window_bounds = array<i64: 64, 256>}, {transform_indices = @transform_2, window_bounds = array<i64: 16, 256>}]} {
    %c0 = arith.constant 0 : index
    %c0_0 = arith.constant 0 : index
    %0 = vector.load %arg2[%c0, %c0_0] : memref<16x64xf32, #tpu.memory_space<vmem>>, vector<16x64xf32>
    %c0_1 = arith.constant 0 : index
    %c0_2 = arith.constant 0 : index
    %1 = vector.load %arg3[%c0_1, %c0_2] : memref<64x256xf32, #tpu.memory_space<vmem>>, vector<64x256xf32>
    %cst = arith.constant dense<0.000000e+00> : vector<16x256xf32>
    %2 = tpu.matmul %0, %1, %cst {dimension_numbers = #tpu.dot_dimension_numbers<[1], [0], [0], [1], [0, 0, 1, 1], [], []>} : vector<16x64xf32>, vector<64x256xf32>, vector<16x256xf32> -> vector<16x256xf32>
    %c0_3 = arith.constant 0 : index
    %c0_4 = arith.constant 0 : index
    %3 = vector.load %arg4[%c0_3, %c0_4] : memref<16x256xf32, #tpu.memory_space<vmem>>, vector<16x256xf32>
    tpu.vector_store %arg4[%c0_3, %c0_4], %2 {strides = array<i32>} : memref<16x256xf32, #tpu.memory_space<vmem>>, vector<16x256xf32>,
    return
  }
  func.func @transform_0(%arg0: i32, %arg1: i32) -> (i32, i32) {
    %c0_i32 = arith.constant 0 : i32
    %c0_i32_0 = arith.constant 0 : i32
    return %arg0, %c0_i32 : i32, i32
  }
  func.func @transform_1(%arg0: i32, %arg1: i32) -> (i32, i32) {
    %c0_i32 = arith.constant 0 : i32
    %c0_i32_0 = arith.constant 0 : i32
    return %c0_i32, %arg1 : i32, i32
  }
  func.func @transform_2(%arg0: i32, %arg1: i32) -> (i32, i32) {
    %c0_i32 = arith.constant 0 : i32
    return %arg0, %arg1 : i32, i32
  }
}

</mosaic_0001>

<llo_original>
// kernel: tpu_custom_call.1
$region0: #{tpu_custom_call.1}
  #allocation0 [shape = 'u32[]', space=smem, size = 0x4, offset = 0x4, fixed_abs, tag = 'smem constant byte address 0x4 - core index']
  #allocation1 [shape = 'u32[144,128]{1,0:T(1,128)}', space=vmem, size = 0x12000, scoped, tag = 'internal scratch']
  %s0 = inlined_call_operand.hbm [shape: f32[16,64], index: 0, kind: input, shape index: {}]
  %s1 = inlined_call_operand.hbm [shape: f32[64,256], index: 1, kind: input, shape index: {}]
  %s2 = inlined_call_operand.hbm [shape: f32[16,256], index: 2, kind: output, shape index: {}]
  %s3 = sld [smem:[#allocation0]]
  $region26: #{tpu_custom_call.1} parent=0
    _
  %s5 = ssub.s32 1, %s3
  %s6 = scalar_select 0, %s5, %s3
  $region1: #{tpu_custom_call.1} parent=0
    #allocation2 [shape = 'u8[8192]{0}', space=vmem, size = 0x2000, scoped, tag = 'input window, operand 0, single buffered']
    #allocation3 [shape = 's32[1]{0}', space=sflag, size = 0x4, scoped, tag = 'scoped memory for tpu_custom_call.1']
    #allocation4 [shape = 's32[1]{0}', space=sflag, size = 0x4, scoped, tag = 'scoped memory for tpu_custom_call.1']
    #allocation5 [shape = 'u8[65536]{0}', space=vmem, size = 0x10000, scoped, tag = 'input window, operand 1, single buffered']
    #allocation6 [shape = 's32[1]{0}', space=sflag, size = 0x4, scoped, tag = 'scoped memory for tpu_custom_call.1']
    #allocation7 [shape = 'u8[16384]{0}', space=vmem, size = 0x4000, scoped, tag = 'output window, operand 0, single buffered']
    %7 = vsyncpa [#allocation3], 0
    %8 = vsyncpa [#allocation6], 0
    %9 = vsyncpa [#allocation4], 0
    // Predicated region
    $region2: #{tpu_custom_call.1} parent=1 // pred_check
      _
    $region3: #{tpu_custom_call.1} parent=1 // pred_check_branch
      %11 = sbr.rel (0) target = $region5
    $region4: #{tpu_custom_call.1} parent=1 // pred_region
      %s13 = ssub.s32 256, 256
      %14 = vsyncadd [#allocation3], %s13
      %s15 = sshll.u32 [#allocation2], 4
      %s16 = int_to_ptr.vmem [resolvable:$true] %s15
      %21 = dma.hbm_to_vmem [thread:$0]  %s0, 256, %s16, [#allocation3], 128, 128, 8
    $region5: #{tpu_custom_call.1} parent=1 // pred_fallthru
      _
    // Predicated region
    $region6: #{tpu_custom_call.1} parent=1 // pred_check
      _
    $region7: #{tpu_custom_call.1} parent=1 // pred_check_branch
      %23 = sbr.rel (0) target = $region9
    $region8: #{tpu_custom_call.1} parent=1 // pred_region
      %s25 = ssub.s32 2048, 2048
      %26 = vsyncadd [#allocation6], %s25
      %s27 = sshll.u32 [#allocation5], 4
      %s28 = int_to_ptr.vmem [resolvable:$true] %s27
      %33 = dma.hbm_to_vmem [thread:$0]  %s1, 2048, %s28, [#allocation6], 256, 256, 16
    $region9: #{tpu_custom_call.1} parent=1 // pred_fallthru
      _
    // Predicated region
    $region10: #{tpu_custom_call.1} parent=1 // pred_check
      _
    $region11: #{tpu_custom_call.1} parent=1 // pred_check_branch
      %35 = sbr.rel (0) target = $region13
    $region12: #{tpu_custom_call.1} parent=1 // pred_region
      %36 = dma.done [#allocation3], 256
    $region13: #{tpu_custom_call.1} parent=1 // pred_fallthru
      _
    // Predicated region
    $region14: #{tpu_custom_call.1} parent=1 // pred_check
      _
    $region15: #{tpu_custom_call.1} parent=1 // pred_check_branch
      %38 = sbr.rel (0) target = $region17
    $region16: #{tpu_custom_call.1} parent=1 // pred_region
      %39 = dma.done [#allocation6], 2048
    $region17: #{tpu_custom_call.1} parent=1 // pred_fallthru
      _
    %v40 = vld [vmem:[#allocation2] sm:$0xff]
    %v41 = vld [vmem:[#allocation2 + $0x8] sm:$0xff]
    %v42 = vld [vmem:[#allocation5] sm:$0xff]
    %v43 = vld [vmem:[#allocation5 + $0x8] sm:$0xff]
    %v44 = vld [vmem:[#allocation5 + $0x10] sm:$0xff]
    %v45 = vld [vmem:[#allocation5 + $0x18] sm:$0xff]
    %v46 = vld [vmem:[#allocation5 + $0x20] sm:$0xff]
    %v47 = vld [vmem:[#allocation5 + $0x28] sm:$0xff]
    %v48 = vld [vmem:[#allocation5 + $0x30] sm:$0xff]
    %v49 = vld [vmem:[#allocation5 + $0x38] sm:$0xff]
    %v50 = vld [vmem:[#allocation5 + $0x40] sm:$0xff]
    %v51 = vld [vmem:[#allocation5 + $0x48] sm:$0xff]
    %v52 = vld [vmem:[#allocation5 + $0x50] sm:$0xff]
    %v53 = vld [vmem:[#allocation5 + $0x58] sm:$0xff]
    %v54 = vld [vmem:[#allocation5 + $0x60] sm:$0xff]
    %v55 = vld [vmem:[#allocation5 + $0x68] sm:$0xff]
    %v56 = vld [vmem:[#allocation5 + $0x70] sm:$0xff]
    %v57 = vld [vmem:[#allocation5 + $0x78] sm:$0xff]
    %vm58 = vcmask 523264
    %v60 = vsel %vm58, %v40, 0
    %v63 = vsel %vm58, %v41, 0
    %65 = vmatprep.subr.mxu0 %v43
    %66 = vmatpush1.msra.mxu0 %v42
    %67 = vmatprep.subr.mxu0 %v45
    %68 = vmatpush1.msra.mxu0 %v44
    %69 = vmatprep.subr.mxu0 %v47
    %70 = vmatpush1.msra.mxu0 %v46
    %71 = vmatprep.subr.mxu0 %v49
    %72 = vmatpush1.msra.mxu0 %v48
    %73 = vmatprep.subr.mxu0 %v51
    %74 = vmatpush1.msra.mxu0 %v50
    %75 = vmatprep.subr.mxu0 %v53
    %76 = vmatpush1.msra.mxu0 %v52
    %77 = vmatprep.subr.mxu0 %v55
    %78 = vmatpush1.msra.mxu0 %v54
    %79 = vmatprep.subr.mxu0 %v57
    %80 = vmatpush1.msra.mxu0 %v56
    %81 = vmatprep.subr.mxu0 0.0
    %82 = vmatpush1.msra.mxu0 0.0
    %83 = vmatprep.subr.mxu0 0.0
    %84 = vmatpush1.msra.mxu0 0.0
    %85 = vmatprep.subr.mxu0 0.0
    %86 = vmatpush1.msra.mxu0 0.0
    %87 = vmatprep.subr.mxu0 0.0
    %88 = vmatpush1.msra.mxu0 0.0
    %89 = vmatprep.subr.mxu0 0.0
    %90 = vmatpush1.msra.mxu0 0.0
    %91 = vmatprep.subr.mxu0 0.0
    %92 = vmatpush1.msra.mxu0 0.0
    %93 = vmatprep.subr.mxu0 0.0
    %94 = vmatpush1.msra.mxu0 0.0
    %95 = vmatprep.subr.mxu0 0.0
    %96 = vmatpush1.msra.mxu0 0.0
    %97 = vmatprep.subr.mxu0 0.0
    %98 = vmatpush1.msra.mxu0 0.0
    %99 = vmatprep.subr.mxu0 0.0
    %100 = vmatpush1.msra.mxu0 0.0
    %101 = vmatprep.subr.mxu0 0.0
    %102 = vmatpush1.msra.mxu0 0.0
    %103 = vmatprep.subr.mxu0 0.0
    %104 = vmatpush1.msra.mxu0 0.0
    %105 = vmatprep.subr.mxu0 0.0
    %106 = vmatpush1.msra.mxu0 0.0
    %107 = vmatprep.subr.mxu0 0.0
    %108 = vmatpush1.msra.mxu0 0.0
    %109 = vmatprep.subr.mxu0 0.0
    %110 = vmatpush1.msra.mxu0 0.0
    %111 = vmatprep.subr.mxu0 0.0
    %112 = vmatpush1.msra.mxu0 0.0
    %113 = vmatprep.subr.mxu0 0.0
    %114 = vmatpush1.msra.mxu0 0.0
    %115 = vmatprep.subr.mxu0 0.0
    %116 = vmatpush1.msra.mxu0 0.0
    %117 = vmatprep.subr.mxu0 0.0
    %118 = vmatpush1.msra.mxu0 0.0
    %119 = vmatprep.subr.mxu0 0.0
    %120 = vmatpush1.msra.mxu0 0.0
    %121 = vmatprep.subr.mxu0 0.0
    %122 = vmatpush1.msra.mxu0 0.0
    %123 = vmatprep.subr.mxu0 0.0
    %124 = vmatpush1.msra.mxu0 0.0
    %125 = vmatprep.subr.mxu0 0.0
    %126 = vmatpush1.msra.mxu0 0.0
    %127 = vmatprep.subr.mxu0 0.0
    %128 = vmatpush1.msra.mxu0 0.0
    %129 = vmatprep.mubr.f32.mxu0 0.0
    %130 = vmatmul.mubr.f32.gmra.mrb[0].mxu0 %v60
    %v131 = vpop.f32.mrb[0].mxu0
    %v132 = vadd.f32 0.0, %v131
    %v133 = vpop.f32.mrb[0].mxu0
    %v134 = vadd.f32 0.0, %v133
    %135 = vmatprep.mubr.f32.mxu0 0.0
    %136 = vmatmul.mubr.f32.gmra.mrb[0].mxu0 %v63
    %v137 = vpop.f32.mrb[0].mxu0
    %v138 = vadd.f32 0.0, %v137
    %v139 = vpop.f32.mrb[0].mxu0
    %v140 = vadd.f32 0.0, %v139
    %141 = vdwg.mxu0
    %142 = vst [vmem:[#allocation7] sm:$0xff] %v132
    %143 = vst [vmem:[#allocation7 + $0x8] sm:$0xff] %v134
    %144 = vst [vmem:[#allocation7 + $0x10] sm:$0xff] %v138
    %145 = vst [vmem:[#allocation7 + $0x18] sm:$0xff] %v140
    // Predicated region
    $region18: #{tpu_custom_call.1} parent=1 // pred_check
      _
    $region19: #{tpu_custom_call.1} parent=1 // pred_check_branch
      %147 = sbr.rel (0) target = $region21
    $region20: #{tpu_custom_call.1} parent=1 // pred_region
      %s149 = ssub.s32 512, 512
      %150 = vsyncadd [#allocation4], %s149
      %s151 = sshll.u32 [#allocation7], 4
      %s152 = int_to_ptr.vmem [resolvable:$true] %s151
      %157 = dma.vmem_to_hbm [thread:$0]  %s152, 512, %s2, [#allocation4], 256, 256, 16
    $region21: #{tpu_custom_call.1} parent=1 // pred_fallthru
      _
    // Predicated region
    $region22: #{tpu_custom_call.1} parent=1 // pred_check
      _
    $region23: #{tpu_custom_call.1} parent=1 // pred_check_branch
      %159 = sbr.rel (0) target = $region25
    $region24: #{tpu_custom_call.1} parent=1 // pred_region
      %160 = dma.done [#allocation4], 512
    $region25: #{tpu_custom_call.1} parent=1 // pred_fallthru
      _
    %161 = vsyncpa [#allocation3], 1
    %162 = vsyncpa [#allocation6], 1
    %163 = vsyncpa [#allocation4], 1

</llo_original>
